<compile_context>
chip_gen: v6e
topology: v6e:2x2x1
jax: 0.10.0
libtpu: 0.0.40
codegen_flags: <defaults>
</compile_context>

<pallas_src>
import functools

import jax
import jax.numpy as jnp
from jax.experimental import pallas as pl
from jax.experimental.pallas import tpu as pltpu


def _round_up(x, m):
    return (x + m - 1) // m * m


def _modulated_matrix_kernel(w_ref, x_ref, ew_ref, ex_ref, t_ref, o_ref):
    # w_ref: (TB, K)        x_ref: (TB, IN)
    # ew_ref: (K, K*IN)     ex_ref: (IN, K*IN)      t_ref: (K*IN, OUT)
    # o_ref: (TB, OUT)
    #
    # Expand w and x onto the fused (k, i) axis with constant 0/1 matrices on
    # the MXU (no cross-lane broadcast / concatenation on the XLU):
    #   w_exp[b, k*IN + i] = w[b, k]
    #   x_exp[b, k*IN + i] = x[b, i]
    w_exp = jnp.dot(w_ref[...], ew_ref[...], preferred_element_type=jnp.float32)
    x_exp = jnp.dot(x_ref[...], ex_ref[...], preferred_element_type=jnp.float32)
    p = w_exp * x_exp                                   # VPU elementwise
    # Single main MXU contraction over K*IN, f32 accumulation.
    o = jnp.dot(p, t_ref[...], preferred_element_type=jnp.float32)
    # Lane-exact (TB, OUT) store; relu epilogue on the VPU.
    o_ref[...] = jnp.maximum(o, 0.0)


def _xla_forward(inputs, weights, temporal):
    """Fused pure-XLA path (also serves as the reference)."""
    K, in_dim, out_dim = temporal.shape
    v = jnp.matmul(weights, temporal.reshape(K, -1),
                   precision=jax.lax.Precision.HIGHEST)
    v = v.reshape(-1, in_dim, out_dim)
    return jax.nn.relu(jnp.einsum("bi,bio->bo", inputs, v,
                                  precision=jax.lax.Precision.HIGHEST))


@functools.partial(jax.jit, static_argnames=("block_b", "small_batch_threshold"))
def modulated_matrix_forward(inputs, weights, temporal, *,
                             block_b=4096, small_batch_threshold=1024):
    """inputs: (B, 15), weights: (B, K), temporal: (K, 15, 11) -> (B, 11) f32."""
    B, in_dim = inputs.shape
    K, in_dim_t, out_dim = temporal.shape
    assert in_dim == in_dim_t and weights.shape == (B, K)

    inputs = inputs.astype(jnp.float32)
    weights = weights.astype(jnp.float32)
    temporal = temporal.astype(jnp.float32)

    # Small-batch fast path: the pallas_call launch dominates at tiny B.
    if B < small_batch_threshold:
        return _xla_forward(inputs, weights, temporal)

    SUB = 8
    ki = K * in_dim                                      # fused contraction axis

    # --- tiny VMEM-resident constants / reshapes (no batch-sized padding) ---
    t2d = temporal.reshape(ki, out_dim)                  # (K*IN, OUT)
    # Ew[k, k*IN + i] = 1  -> (w @ Ew)[b, k*IN + i] = w[b, k]
    ew = jnp.repeat(jnp.eye(K, dtype=jnp.float32), in_dim, axis=1)   # (K, K*IN)
    # Ex[i, k*IN + i] = 1  -> (x @ Ex)[b, k*IN + i] = x[b, i]
    ex = jnp.tile(jnp.eye(in_dim, dtype=jnp.float32), (1, K))        # (IN, K*IN)

    # --- batch tiling: multiple of 8 sublanes; ragged last tile is masked ---
    tb = min(_round_up(block_b, SUB), _round_up(B, SUB))
    # Keep >= 2 grid steps when B allows, so the "parallel" axis can shard
    # across v7x's two TensorCores (no-op on v5e/v6e).
    if B > 2 * SUB and pl.cdiv(B, tb) < 2:
        tb = _round_up(pl.cdiv(B, 2), SUB)
    grid = (pl.cdiv(B, tb),)

    # Advisory cost hint for XLA's scheduler.
    flops = 2 * B * ki * (K + in_dim + out_dim) + B * ki
    bytes_accessed = 4 * (B * (K + in_dim + out_dim)
                          + ki * (K + in_dim + out_dim))
    cost = pl.CostEstimate(flops=flops, transcendentals=0,
                           bytes_accessed=bytes_accessed)

    out = pl.pallas_call(
        _modulated_matrix_kernel,
        out_shape=jax.ShapeDtypeStruct((B, out_dim), jnp.float32),
        grid=grid,
        in_specs=[
            pl.BlockSpec((tb, K), lambda i: (i, 0)),          # weights tile
            pl.BlockSpec((tb, in_dim), lambda i: (i, 0)),     # inputs tile
            pl.BlockSpec((K, ki), lambda i: (0, 0)),          # Ew, VMEM-resident
            pl.BlockSpec((in_dim, ki), lambda i: (0, 0)),     # Ex, VMEM-resident
            pl.BlockSpec((ki, out_dim), lambda i: (0, 0)),    # temporal, resident
        ],
        out_specs=pl.BlockSpec((tb, out_dim), lambda i: (i, 0)),
        compiler_params=pltpu.CompilerParams(
            # Independent batch tiles -> megacore-shardable on v7x.
            dimension_semantics=("parallel",),
        ),
        cost_estimate=cost,
    )(weights, inputs, ew, ex, t2d)

    return out


if __name__ == "__main__":
    IN_DIM = 15      # self.input_shape
    OUT_DIM = 11     # self.output_shape

    key = jax.random.PRNGKey(0)

    def make_case(key, b, k):
        k_t, k_x, k_w, key = jax.random.split(key, 4)
        temporal = jax.random.normal(k_t, (k, IN_DIM, OUT_DIM), dtype=jnp.float32)
        inputs = jax.random.normal(k_x, (b, IN_DIM), dtype=jnp.float32)
        weights = jax.random.normal(k_w, (b, k), dtype=jnp.float32)
        return key, inputs, weights, temporal

    # ---- case 1: module's nominal small shapes (B=2, K=4); force kernel ----
    key, inputs, weights, temporal = make_case(key, 2, 4)
    out = jax.block_until_ready(
        modulated_matrix_forward(inputs, weights, temporal,
                                 small_batch_threshold=0))
    ref = _xla_forward(inputs, weights, temporal)
    assert out.shape == (2, OUT_DIM)
    assert jnp.allclose(out, ref, atol=1e-4, rtol=1e-4), "case1 mismatch"

    # ---- case 2: ragged batch + multi-step grid (B=37, K=6, tb=16) ---------
    key, inputs2, weights2, temporal2 = make_case(key, 37, 6)
    out2 = jax.block_until_ready(
        modulated_matrix_forward(inputs2, weights2, temporal2,
                                 block_b=16, small_batch_threshold=0))
    ref2 = _xla_forward(inputs2, weights2, temporal2)
    assert out2.shape == (37, OUT_DIM)
    assert jnp.allclose(out2, ref2, atol=1e-4, rtol=1e-4), "case2 mismatch"

    # ---- case 3: larger batch, default tiling (2 grid steps, ragged tile) --
    key, inputs3, weights3, temporal3 = make_case(key, 3000, 4)
    out3 = jax.block_until_ready(
        modulated_matrix_forward(inputs3, weights3, temporal3))
    ref3 = _xla_forward(inputs3, weights3, temporal3)
    assert out3.shape == (3000, OUT_DIM)
    assert jnp.allclose(out3, ref3, atol=1e-4, rtol=1e-4), "case3 mismatch"

    print("KERNEL_OK")
</pallas_src>

<mosaic_0001>
module attributes {stable_mosaic.version = 11 : i64} {
  func.func @_modulated_matrix_kernel(%arg0: i32, %arg1: memref<8x4xf32, #tpu.memory_space<vmem>>, %arg2: memref<8x15xf32, #tpu.memory_space<vmem>>, %arg3: memref<4x60xf32, #tpu.memory_space<vmem>>, %arg4: memref<15x60xf32, #tpu.memory_space<vmem>>, %arg5: memref<60x11xf32, #tpu.memory_space<vmem>>, %arg6: memref<8x11xf32, #tpu.memory_space<vmem>>) attributes {dimension_semantics = [#tpu.dimension_semantics<parallel>], iteration_bounds = array<i64: 1>, scalar_prefetch = 0 : i64, scratch_operands = 0 : i64, tpu.core_type = #tpu.core_type<tc>, window_params = [{transform_indices = @transform_0, window_bounds = array<i64: 8, 4>}, {transform_indices = @transform_1, window_bounds = array<i64: 8, 15>}, {pipeline_mode = #tpu.pipeline_mode<synchronous>, transform_indices = @transform_2, window_bounds = array<i64: 4, 60>}, {pipeline_mode = #tpu.pipeline_mode<synchronous>, transform_indices = @transform_3, window_bounds = array<i64: 15, 60>}, {pipeline_mode = #tpu.pipeline_mode<synchronous>, transform_indices = @transform_4, window_bounds = array<i64: 60, 11>}, {transform_indices = @transform_5, window_bounds = array<i64: 8, 11>}]} {
    %c0 = arith.constant 0 : index
    %c0_0 = arith.constant 0 : index
    %0 = vector.load %arg1[%c0, %c0_0] : memref<8x4xf32, #tpu.memory_space<vmem>>, vector<8x4xf32>
    %c0_1 = arith.constant 0 : index
    %c0_2 = arith.constant 0 : index
    %1 = vector.load %arg3[%c0_1, %c0_2] : memref<4x60xf32, #tpu.memory_space<vmem>>, vector<4x60xf32>
    %cst = arith.constant dense<0.000000e+00> : vector<8x60xf32>
    %2 = tpu.matmul %0, %1, %cst {dimension_numbers = #tpu.dot_dimension_numbers<[1], [0], [0], [1], [0, 0, 1, 1], [], []>} : vector<8x4xf32>, vector<4x60xf32>, vector<8x60xf32> -> vector<8x60xf32>
    %c0_3 = arith.constant 0 : index
    %c0_4 = arith.constant 0 : index
    %3 = vector.load %arg2[%c0_3, %c0_4] : memref<8x15xf32, #tpu.memory_space<vmem>>, vector<8x15xf32>
    %c0_5 = arith.constant 0 : index
    %c0_6 = arith.constant 0 : index
    %4 = vector.load %arg4[%c0_5, %c0_6] : memref<15x60xf32, #tpu.memory_space<vmem>>, vector<15x60xf32>
    %cst_7 = arith.constant dense<0.000000e+00> : vector<8x60xf32>
    %5 = tpu.matmul %3, %4, %cst_7 {dimension_numbers = #tpu.dot_dimension_numbers<[1], [0], [0], [1], [0, 0, 1, 1], [], []>} : vector<8x15xf32>, vector<15x60xf32>, vector<8x60xf32> -> vector<8x60xf32>
    %6 = arith.mulf %2, %5 : vector<8x60xf32>
    %c0_8 = arith.constant 0 : index
    %c0_9 = arith.constant 0 : index
    %7 = vector.load %arg5[%c0_8, %c0_9] : memref<60x11xf32, #tpu.memory_space<vmem>>, vector<60x11xf32>
    %cst_10 = arith.constant dense<0.000000e+00> : vector<8x11xf32>
    %8 = tpu.matmul %6, %7, %cst_10 {dimension_numbers = #tpu.dot_dimension_numbers<[1], [0], [0], [1], [0, 0, 1, 1], [], []>} : vector<8x60xf32>, vector<60x11xf32>, vector<8x11xf32> -> vector<8x11xf32>
    %cst_11 = arith.constant 0.000000e+00 : f32
    %9 = vector.broadcast %cst_11 : f32 to vector<8x11xf32>
    %10 = arith.maximumf %8, %9 : vector<8x11xf32>
    %c0_12 = arith.constant 0 : index
    %c0_13 = arith.constant 0 : index
    %11 = vector.load %arg6[%c0_12, %c0_13] : memref<8x11xf32, #tpu.memory_space<vmem>>, vector<8x11xf32>
    tpu.vector_store %arg6[%c0_12, %c0_13], %10 {strides = array<i32>} : memref<8x11xf32, #tpu.memory_space<vmem>>, vector<8x11xf32>,
    return
  }
  func.func @transform_0(%arg0: i32) -> (i32, i32) {
    %c0_i32 = arith.constant 0 : i32
    %c0_i32_0 = arith.constant 0 : i32
    return %arg0, %c0_i32 : i32, i32
  }
  func.func @transform_1(%arg0: i32) -> (i32, i32) {
    %c0_i32 = arith.constant 0 : i32
    %c0_i32_0 = arith.constant 0 : i32
    return %arg0, %c0_i32 : i32, i32
  }
  func.func @transform_2(%arg0: i32) -> (i32, i32) {
    %c0_i32 = arith.constant 0 : i32
    %c0_i32_0 = arith.constant 0 : i32
    %c0_i32_1 = arith.constant 0 : i32
    return %c0_i32, %c0_i32_0 : i32, i32
  }
  func.func @transform_3(%arg0: i32) -> (i32, i32) {
    %c0_i32 = arith.constant 0 : i32
    %c0_i32_0 = arith.constant 0 : i32
    %c0_i32_1 = arith.constant 0 : i32
    return %c0_i32, %c0_i32_0 : i32, i32
  }
  func.func @transform_4(%arg0: i32) -> (i32, i32) {
    %c0_i32 = arith.constant 0 : i32
    %c0_i32_0 = arith.constant 0 : i32
    %c0_i32_1 = arith.constant 0 : i32
    return %c0_i32, %c0_i32_0 : i32, i32
  }
  func.func @transform_5(%arg0: i32) -> (i32, i32) {
    %c0_i32 = arith.constant 0 : i32
    %c0_i32_0 = arith.constant 0 : i32
    return %arg0, %c0_i32 : i32, i32
  }
}

</mosaic_0001>

<llo_original>
// kernel: tile.9
$region0: #{tile.9}
  %s0 = inlined_call_operand.vmem [shape: f32[15,4,15], index: 0, kind: input, shape index: {}]
  %s1 = inlined_call_operand.vmem [shape: f32[15,60], index: 1, kind: output, shape index: {}]
  $region1: #{tile.9} parent=0
    #allocation0 [shape = 'u8[61440]{0}', space=vmem, size = 0xf000, scoped, tag = 'scoped mem for input reshape']
    %s3 = sshll.u32 1, 4
    %s4 = ssub.s32 %s3, 1
    %s5 = smul.addr 4, 14
    %s6 = scalar_lea.vmem %s0, %s5
    %v7 = vld [vmem:[%s6] sm:%s4]
    %s8 = scalar_lea.vmem [#allocation0], 112
    %9 = vst [vmem:[%s8] sm:%s4] %v7
    %s10 = smul.addr 4, 13
    %s11 = scalar_lea.vmem %s0, %s10
    %v12 = vld [vmem:[%s11] sm:%s4]
    %s13 = scalar_lea.vmem [#allocation0], 104
    %14 = vst [vmem:[%s13] sm:%s4] %v12
    %s15 = smul.addr 4, 12
    %s16 = scalar_lea.vmem %s0, %s15
    %v17 = vld [vmem:[%s16] sm:%s4]
    %s18 = scalar_lea.vmem [#allocation0], 96
    %19 = vst [vmem:[%s18] sm:%s4] %v17
    %s20 = smul.addr 4, 11
    %s21 = scalar_lea.vmem %s0, %s20
    %v22 = vld [vmem:[%s21] sm:%s4]
    %s23 = scalar_lea.vmem [#allocation0], 88
    %24 = vst [vmem:[%s23] sm:%s4] %v22
    %s25 = smul.addr 4, 10
    %s26 = scalar_lea.vmem %s0, %s25
    %v27 = vld [vmem:[%s26] sm:%s4]
    %s28 = scalar_lea.vmem [#allocation0], 80
    %29 = vst [vmem:[%s28] sm:%s4] %v27
    %s30 = smul.addr 4, 9
    %s31 = scalar_lea.vmem %s0, %s30
    %v32 = vld [vmem:[%s31] sm:%s4]
    %s33 = scalar_lea.vmem [#allocation0], 72
    %34 = vst [vmem:[%s33] sm:%s4] %v32
    %s35 = smul.addr 4, 8
    %s36 = scalar_lea.vmem %s0, %s35
    %v37 = vld [vmem:[%s36] sm:%s4]
    %s38 = scalar_lea.vmem [#allocation0], 64
    %39 = vst [vmem:[%s38] sm:%s4] %v37
    %s40 = smul.addr 4, 7
    %s41 = scalar_lea.vmem %s0, %s40
    %v42 = vld [vmem:[%s41] sm:%s4]
    %s43 = scalar_lea.vmem [#allocation0], 56
    %44 = vst [vmem:[%s43] sm:%s4] %v42
    %s45 = smul.addr 4, 6
    %s46 = scalar_lea.vmem %s0, %s45
    %v47 = vld [vmem:[%s46] sm:%s4]
    %s48 = scalar_lea.vmem [#allocation0], 48
    %49 = vst [vmem:[%s48] sm:%s4] %v47
    %s50 = smul.addr 4, 5
    %s51 = scalar_lea.vmem %s0, %s50
    %v52 = vld [vmem:[%s51] sm:%s4]
    %s53 = scalar_lea.vmem [#allocation0], 40
    %54 = vst [vmem:[%s53] sm:%s4] %v52
    %s55 = smul.addr 4, 4
    %s56 = scalar_lea.vmem %s0, %s55
    %v57 = vld [vmem:[%s56] sm:%s4]
    %s58 = scalar_lea.vmem [#allocation0], 32
    %59 = vst [vmem:[%s58] sm:%s4] %v57
    %s60 = smul.addr 4, 3
    %s61 = scalar_lea.vmem %s0, %s60
    %v62 = vld [vmem:[%s61] sm:%s4]
    %s63 = scalar_lea.vmem [#allocation0], 24
    %64 = vst [vmem:[%s63] sm:%s4] %v62
    %s65 = smul.addr 4, 2
    %s66 = scalar_lea.vmem %s0, %s65
    %v67 = vld [vmem:[%s66] sm:%s4]
    %s68 = scalar_lea.vmem [#allocation0], 16
    %69 = vst [vmem:[%s68] sm:%s4] %v67
    %s70 = scalar_lea.vmem %s0, 4
    %v71 = vld [vmem:[%s70] sm:%s4]
    %s72 = scalar_lea.vmem [#allocation0], 8
    %73 = vst [vmem:[%s72] sm:%s4] %v71
    %v74 = vld [vmem:[%s0] sm:%s4]
    %75 = vst [vmem:[#allocation0] sm:%s4] %v74
    %v76 = vld [vmem:[#allocation0] ss:$8 sm:$0xf]
    %v77 = vld [vmem:[#allocation0] ss:$8 sm:$0xf0]
    %vm78 = vcmask 1047556
    %v79 = vsel %vm78, %v77, %v76
    %vm80 = vcmask 121856
    %81 = vst.msk [vmem:[%s1] sm:$0xff] %vm80, %v79
    %s82 = scalar_lea.vmem [#allocation0], 64
    %v83 = vld [vmem:[%s82] ss:$8 sm:$0xf]
    %s84 = scalar_lea.vmem [#allocation0], 64
    %v85 = vld [vmem:[%s84] ss:$8 sm:$0x70]
    %vm86 = vcmask 1046532
    %v87 = vsel %vm86, %v85, %v83
    %vm88 = vcmask 121856
    %s89 = scalar_lea.vmem %s1, 8
    %90 = vst.msk [vmem:[%s89] sm:$0x7f] %vm88, %v87
    %s91 = scalar_lea.vmem [#allocation0], 3
    %v92 = vld [vmem:[%s91] ss:$8 sm:$0xf]
    %s93 = scalar_lea.vmem [#allocation0], 3
    %v94 = vld [vmem:[%s93] ss:$8 sm:$0xf0]
    %vm95 = vcmask 1047556
    %v96 = vsel %vm95, %v94, %v92
    %97 = vrot.lane.b32.xlu0 %v96, 45
    %v98 = vpop.permute.xlu0 %97
    %vm99 = vcmask 490856
    %100 = vst.msk [vmem:[%s1] sm:$0xff] %vm99, %v98
    %s101 = scalar_lea.vmem [#allocation0], 67
    %v102 = vld [vmem:[%s101] ss:$8 sm:$0xf]
    %s103 = scalar_lea.vmem [#allocation0], 67
    %v104 = vld [vmem:[%s103] ss:$8 sm:$0x70]
    %vm105 = vcmask 1046532
    %v106 = vsel %vm105, %v104, %v102
    %107 = vrot.lane.b32.xlu0 %v106, 45
    %v108 = vpop.permute.xlu0 %107
    %vm109 = vcmask 490856
    %s110 = scalar_lea.vmem %s1, 8
    %111 = vst.msk [vmem:[%s110] sm:$0x7f] %vm109, %v108
    %s112 = scalar_lea.vmem [#allocation0], 2
    %v113 = vld [vmem:[%s112] ss:$8 sm:$0xf]
    %s114 = scalar_lea.vmem [#allocation0], 2
    %v115 = vld [vmem:[%s114] ss:$8 sm:$0xf0]
    %vm116 = vcmask 1047556
    %v117 = vsel %vm116, %v115, %v113
    %118 = vrot.lane.b32.xlu0 %v117, 30
    %v119 = vpop.permute.xlu0 %118
    %vm120 = vcmask 367856
    %121 = vst.msk [vmem:[%s1] sm:$0xff] %vm120, %v119
    %s122 = scalar_lea.vmem [#allocation0], 66
    %v123 = vld [vmem:[%s122] ss:$8 sm:$0xf]
    %s124 = scalar_lea.vmem [#allocation0], 66
    %v125 = vld [vmem:[%s124] ss:$8 sm:$0x70]
    %vm126 = vcmask 1046532
    %v127 = vsel %vm126, %v125, %v123
    %128 = vrot.lane.b32.xlu0 %v127, 30
    %v129 = vpop.permute.xlu0 %128
    %vm130 = vcmask 367856
    %s131 = scalar_lea.vmem %s1, 8
    %132 = vst.msk [vmem:[%s131] sm:$0x7f] %vm130, %v129
    %s133 = scalar_lea.vmem [#allocation0], 1
    %v134 = vld [vmem:[%s133] ss:$8 sm:$0xf]
    %s135 = scalar_lea.vmem [#allocation0], 1
    %v136 = vld [vmem:[%s135] ss:$8 sm:$0xf0]
    %vm137 = vcmask 1047556
    %v138 = vsel %vm137, %v136, %v134
    %139 = vrot.lane.b32.xlu0 %v138, 15
    %v140 = vpop.permute.xlu0 %139
    %vm141 = vcmask 244856
    %142 = vst.msk [vmem:[%s1] sm:$0xff] %vm141, %v140
    %s143 = scalar_lea.vmem [#allocation0], 65
    %v144 = vld [vmem:[%s143] ss:$8 sm:$0xf]
    %s145 = scalar_lea.vmem [#allocation0], 65
    %v146 = vld [vmem:[%s145] ss:$8 sm:$0x70]
    %vm147 = vcmask 1046532
    %v148 = vsel %vm147, %v146, %v144
    %149 = vrot.lane.b32.xlu0 %v148, 15
    %v150 = vpop.permute.xlu0 %149
    %vm151 = vcmask 244856
    %s152 = scalar_lea.vmem %s1, 8
    %153 = vst.msk [vmem:[%s152] sm:$0x7f] %vm151, %v150

// kernel: modulated_matrix_forward.1
$region0: #{modulated_matrix_forward.1}
  #allocation0 [shape = 'u32[]', space=smem, size = 0x4, offset = 0x4, fixed_abs, tag = 'smem constant byte address 0x4 - core index']
  #allocation1 [shape = 'u32[144,128]{1,0:T(1,128)}', space=vmem, size = 0x12000, scoped, tag = 'internal scratch']
  %s0 = inlined_call_operand.vmem [shape: f32[2,4], index: 0, kind: input, shape index: {}]
  %s1 = inlined_call_operand.vmem [shape: f32[2,15], index: 1, kind: input, shape index: {}]
  %s2 = inlined_call_operand.vmem [shape: f32[4,60], index: 2, kind: input, shape index: {}]
  %s3 = inlined_call_operand.vmem [shape: f32[15,60], index: 3, kind: input, shape index: {}]
  %s4 = inlined_call_operand.vmem [shape: f32[60,11], index: 4, kind: input, shape index: {}]
  %s5 = inlined_call_operand.hbm [shape: f32[2,11], index: 5, kind: output, shape index: {}]
  %s6 = sld [smem:[#allocation0]]
  $region30: #{modulated_matrix_forward.1} parent=0
    _
  %s8 = ssub.s32 1, %s6
  %s9 = scalar_select 0, %s8, %s6
  $region1: #{modulated_matrix_forward.1} parent=0
    #allocation2 [shape = 'u8[4096]{0}', space=vmem, size = 0x1000, scoped, tag = 'output window, operand 0, single buffered']
    #allocation3 [shape = 's32[1]{0}', space=sflag, size = 0x4, scoped, tag = 'scoped memory for modulated_matrix_forward.1']
    %10 = vsyncpa [#allocation3], 0
    // Predicated region
    $region2: #{modulated_matrix_forward.1} parent=1 // pred_check
      _
    $region3: #{modulated_matrix_forward.1} parent=1 // pred_check_branch
      %12 = sbr.rel (0) target = $region5
    $region4: #{modulated_matrix_forward.1} parent=1 // pred_region
      _
    $region5: #{modulated_matrix_forward.1} parent=1 // pred_fallthru
      _
    // Predicated region
    $region6: #{modulated_matrix_forward.1} parent=1 // pred_check
      _
    $region7: #{modulated_matrix_forward.1} parent=1 // pred_check_branch
      %14 = sbr.rel (0) target = $region9
    $region8: #{modulated_matrix_forward.1} parent=1 // pred_region
      _
    $region9: #{modulated_matrix_forward.1} parent=1 // pred_fallthru
      _
    // Predicated region
    $region10: #{modulated_matrix_forward.1} parent=1 // pred_check
      _
    $region11: #{modulated_matrix_forward.1} parent=1 // pred_check_branch
      %16 = sbr.rel (0) target = $region13
    $region12: #{modulated_matrix_forward.1} parent=1 // pred_region
      _
    $region13: #{modulated_matrix_forward.1} parent=1 // pred_fallthru
      _
    // Predicated region
    $region14: #{modulated_matrix_forward.1} parent=1 // pred_check
      _
    $region15: #{modulated_matrix_forward.1} parent=1 // pred_check_branch
      %18 = sbr.rel (0) target = $region17
    $region16: #{modulated_matrix_forward.1} parent=1 // pred_region
      _
    $region17: #{modulated_matrix_forward.1} parent=1 // pred_fallthru
      _
    // Predicated region
    $region18: #{modulated_matrix_forward.1} parent=1 // pred_check
      _
    $region19: #{modulated_matrix_forward.1} parent=1 // pred_check_branch
      %20 = sbr.rel (0) target = $region21
    $region20: #{modulated_matrix_forward.1} parent=1 // pred_region
      _
    $region21: #{modulated_matrix_forward.1} parent=1 // pred_fallthru
      _
    %v21 = vld [vmem:[%s0] sm:$0xff]
    %v22 = vld [vmem:[%s2] sm:$0xf]
    %vm23 = vcmask 31744
    %v25 = vsel %vm23, %v21, 0
    %vm27 = vcmask 1043456
    %v29 = vsel %vm27, %v22, 0
    %31 = vmatprep.subr.mxu0 0.0
    %32 = vmatpush1.msra.mxu0 0.0
    %33 = vmatprep.subr.mxu0 0.0
    %34 = vmatpush1.msra.mxu0 0.0
    %35 = vmatprep.subr.mxu0 0.0
    %36 = vmatpush1.msra.mxu0 0.0
    %37 = vmatprep.subr.mxu0 0.0
    %38 = vmatpush1.msra.mxu0 0.0
    %39 = vmatprep.subr.mxu0 0.0
    %40 = vmatpush1.msra.mxu0 0.0
    %41 = vmatprep.subr.mxu0 0.0
    %42 = vmatpush1.msra.mxu0 0.0
    %43 = vmatprep.subr.mxu0 0.0
    %44 = vmatpush1.msra.mxu0 0.0
    %45 = vmatprep.subr.mxu0 0.0
    %46 = vmatpush1.msra.mxu0 0.0
    %47 = vmatprep.subr.mxu0 0.0
    %48 = vmatpush1.msra.mxu0 0.0
    %49 = vmatprep.subr.mxu0 0.0
    %50 = vmatpush1.msra.mxu0 0.0
    %51 = vmatprep.subr.mxu0 0.0
    %52 = vmatpush1.msra.mxu0 0.0
    %53 = vmatprep.subr.mxu0 0.0
    %54 = vmatpush1.msra.mxu0 0.0
    %55 = vmatprep.subr.mxu0 0.0
    %56 = vmatpush1.msra.mxu0 0.0
    %57 = vmatprep.subr.mxu0 0.0
    %58 = vmatpush1.msra.mxu0 0.0
    %59 = vmatprep.subr.mxu0 0.0
    %60 = vmatpush1.msra.mxu0 0.0
    %61 = vmatprep.subr.mxu0 0.0
    %62 = vmatpush1.msra.mxu0 %v29
    %63 = vmatprep.subr.mxu0 0.0
    %64 = vmatpush2.msra.mxu0 0.0
    %65 = vmatprep.subr.mxu0 0.0
    %66 = vmatpush2.msra.mxu0 0.0
    %67 = vmatprep.subr.mxu0 0.0
    %68 = vmatpush2.msra.mxu0 0.0
    %69 = vmatprep.subr.mxu0 0.0
    %70 = vmatpush2.msra.mxu0 0.0
    %71 = vmatprep.subr.mxu0 0.0
    %72 = vmatpush2.msra.mxu0 0.0
    %73 = vmatprep.subr.mxu0 0.0
    %74 = vmatpush2.msra.mxu0 0.0
    %75 = vmatprep.subr.mxu0 0.0
    %76 = vmatpush2.msra.mxu0 0.0
    %77 = vmatprep.subr.mxu0 0.0
    %78 = vmatpush2.msra.mxu0 0.0
    %79 = vmatprep.subr.mxu0 0.0
    %80 = vmatpush2.msra.mxu0 0.0
    %81 = vmatprep.subr.mxu0 0.0
    %82 = vmatpush2.msra.mxu0 0.0
    %83 = vmatprep.subr.mxu0 0.0
    %84 = vmatpush2.msra.mxu0 0.0
    %85 = vmatprep.subr.mxu0 0.0
    %86 = vmatpush2.msra.mxu0 0.0
    %87 = vmatprep.subr.mxu0 0.0
    %88 = vmatpush2.msra.mxu0 0.0
    %89 = vmatprep.subr.mxu0 0.0
    %90 = vmatpush2.msra.mxu0 0.0
    %91 = vmatprep.subr.mxu0 0.0
    %92 = vmatpush2.msra.mxu0 0.0
    %93 = vmatprep.subr.mxu0 0.0
    %94 = vmatpush2.msra.mxu0 0.0
    %95 = vmatprep.mubr.f32.mxu0 0.0
    %96 = vmatmul.mubr.f32.gmra.mxu0 %v25
    %v97 = vpop.f32.mrf.mxu0
    %v98 = vadd.f32 0.0, %v97
    %v99 = vpop.f32.mrf.mxu0
    %100 = vdwg.mxu0
    %v101 = vld [vmem:[%s1] sm:$0xff]
    %v102 = vld [vmem:[%s3] sm:$0xff]
    %v103 = vld [vmem:[%s3 + $0x8] sm:$0x7f]
    %vm104 = vcmask 121856
    %v106 = vsel %vm104, %v101, 0
    %vm108 = vcmask 1046528
    %v110 = vsel %vm108, %v103, 0
    %112 = vmatprep.subr.mxu0 0.0
    %113 = vmatpush1.msra.mxu0 0.0
    %114 = vmatprep.subr.mxu0 0.0
    %115 = vmatpush1.msra.mxu0 0.0
    %116 = vmatprep.subr.mxu0 0.0
    %117 = vmatpush1.msra.mxu0 0.0
    %118 = vmatprep.subr.mxu0 0.0
    %119 = vmatpush1.msra.mxu0 0.0
    %120 = vmatprep.subr.mxu0 0.0
    %121 = vmatpush1.msra.mxu0 0.0
    %122 = vmatprep.subr.mxu0 0.0
    %123 = vmatpush1.msra.mxu0 0.0
    %124 = vmatprep.subr.mxu0 0.0
    %125 = vmatpush1.msra.mxu0 0.0
    %126 = vmatprep.subr.mxu0 0.0
    %127 = vmatpush1.msra.mxu0 0.0
    %128 = vmatprep.subr.mxu0 0.0
    %129 = vmatpush1.msra.mxu0 0.0
    %130 = vmatprep.subr.mxu0 0.0
    %131 = vmatpush1.msra.mxu0 0.0
    %132 = vmatprep.subr.mxu0 0.0
    %133 = vmatpush1.msra.mxu0 0.0
    %134 = vmatprep.subr.mxu0 0.0
    %135 = vmatpush1.msra.mxu0 0.0
    %136 = vmatprep.subr.mxu0 0.0
    %137 = vmatpush1.msra.mxu0 0.0
    %138 = vmatprep.subr.mxu0 0.0
    %139 = vmatpush1.msra.mxu0 0.0
    %140 = vmatprep.subr.mxu0 0.0
    %141 = vmatpush1.msra.mxu0 %v110
    %142 = vmatprep.subr.mxu0 0.0
    %143 = vmatpush1.msra.mxu0 %v102
    %144 = vmatprep.subr.mxu0 0.0
    %145 = vmatpush2.msra.mxu0 0.0
    %146 = vmatprep.subr.mxu0 0.0
    %147 = vmatpush2.msra.mxu0 0.0
    %148 = vmatprep.subr.mxu0 0.0
    %149 = vmatpush2.msra.mxu0 0.0
    %150 = vmatprep.subr.mxu0 0.0
    %151 = vmatpush2.msra.mxu0 0.0
    %152 = vmatprep.subr.mxu0 0.0
    %153 = vmatpush2.msra.mxu0 0.0
    %154 = vmatprep.subr.mxu0 0.0
    %155 = vmatpush2.msra.mxu0 0.0
    %156 = vmatprep.subr.mxu0 0.0
    %157 = vmatpush2.msra.mxu0 0.0
    %158 = vmatprep.subr.mxu0 0.0
    %159 = vmatpush2.msra.mxu0 0.0
    %160 = vmatprep.subr.mxu0 0.0
    %161 = vmatpush2.msra.mxu0 0.0
    %162 = vmatprep.subr.mxu0 0.0
    %163 = vmatpush2.msra.mxu0 0.0
    %164 = vmatprep.subr.mxu0 0.0
    %165 = vmatpush2.msra.mxu0 0.0
    %166 = vmatprep.subr.mxu0 0.0
    %167 = vmatpush2.msra.mxu0 0.0
    %168 = vmatprep.subr.mxu0 0.0
    %169 = vmatpush2.msra.mxu0 0.0
    %170 = vmatprep.subr.mxu0 0.0
    %171 = vmatpush2.msra.mxu0 0.0
    %172 = vmatprep.subr.mxu0 0.0
    %173 = vmatpush2.msra.mxu0 0.0
    %174 = vmatprep.subr.mxu0 0.0
    %175 = vmatpush2.msra.mxu0 0.0
    %176 = vmatprep.mubr.f32.mxu0 0.0
    %177 = vmatmul.mubr.f32.gmra.mxu0 %v106
    %v178 = vpop.f32.mrf.mxu0
    %v179 = vadd.f32 0.0, %v178
    %v180 = vpop.f32.mrf.mxu0
    %181 = vdwg.mxu0
    %v182 = vmul.f32 %v98, %v179
    %v183 = vld [vmem:[%s4] sm:$0xff]
    %v184 = vld [vmem:[%s4 + $0x8] sm:$0xff]
    %v185 = vld [vmem:[%s4 + $0x10] sm:$0xff]
    %v186 = vld [vmem:[%s4 + $0x18] sm:$0xff]
    %v187 = vld [vmem:[%s4 + $0x20] sm:$0xff]
    %v188 = vld [vmem:[%s4 + $0x28] sm:$0xff]
    %v189 = vld [vmem:[%s4 + $0x30] sm:$0xff]
    %v190 = vld [vmem:[%s4 + $0x38] sm:$0xf]
    %vm191 = vcmask 490496
    %v193 = vsel %vm191, %v182, 0
    %v196 = vsel %vm27, %v190, 0
    %198 = vmatprep.subr.mxu0 0.0
    %199 = vmatpush1.msra.mxu0 0.0
    %200 = vmatprep.subr.mxu0 0.0
    %201 = vmatpush1.msra.mxu0 0.0
    %202 = vmatprep.subr.mxu0 0.0
    %203 = vmatpush1.msra.mxu0 0.0
    %204 = vmatprep.subr.mxu0 0.0
    %205 = vmatpush1.msra.mxu0 0.0
    %206 = vmatprep.subr.mxu0 0.0
    %207 = vmatpush1.msra.mxu0 0.0
    %208 = vmatprep.subr.mxu0 0.0
    %209 = vmatpush1.msra.mxu0 0.0
    %210 = vmatprep.subr.mxu0 0.0
    %211 = vmatpush1.msra.mxu0 0.0
    %212 = vmatprep.subr.mxu0 0.0
    %213 = vmatpush1.msra.mxu0 0.0
    %214 = vmatprep.subr.mxu0 0.0
    %215 = vmatpush1.msra.mxu0 %v196
    %216 = vmatprep.subr.mxu0 0.0
    %217 = vmatpush1.msra.mxu0 %v189
    %218 = vmatprep.subr.mxu0 0.0
    %219 = vmatpush1.msra.mxu0 %v188
    %220 = vmatprep.subr.mxu0 0.0
    %221 = vmatpush1.msra.mxu0 %v187
    %222 = vmatprep.subr.mxu0 0.0
    %223 = vmatpush1.msra.mxu0 %v186
    %224 = vmatprep.subr.mxu0 0.0
    %225 = vmatpush1.msra.mxu0 %v185
    %226 = vmatprep.subr.mxu0 0.0
    %227 = vmatpush1.msra.mxu0 %v184
    %228 = vmatprep.subr.mxu0 0.0
    %229 = vmatpush1.msra.mxu0 %v183
    %230 = vmatprep.subr.mxu0 0.0
    %231 = vmatpush2.msra.mxu0 0.0
    %232 = vmatprep.subr.mxu0 0.0
    %233 = vmatpush2.msra.mxu0 0.0
    %234 = vmatprep.subr.mxu0 0.0
    %235 = vmatpush2.msra.mxu0 0.0
    %236 = vmatprep.subr.mxu0 0.0
    %237 = vmatpush2.msra.mxu0 0.0
    %238 = vmatprep.subr.mxu0 0.0
    %239 = vmatpush2.msra.mxu0 0.0
    %240 = vmatprep.subr.mxu0 0.0
    %241 = vmatpush2.msra.mxu0 0.0
    %242 = vmatprep.subr.mxu0 0.0
    %243 = vmatpush2.msra.mxu0 0.0
    %244 = vmatprep.subr.mxu0 0.0
    %245 = vmatpush2.msra.mxu0 0.0
    %246 = vmatprep.subr.mxu0 0.0
    %247 = vmatpush2.msra.mxu0 0.0
    %248 = vmatprep.subr.mxu0 0.0
    %249 = vmatpush2.msra.mxu0 0.0
    %250 = vmatprep.subr.mxu0 0.0
    %251 = vmatpush2.msra.mxu0 0.0
    %252 = vmatprep.subr.mxu0 0.0
    %253 = vmatpush2.msra.mxu0 0.0
    %254 = vmatprep.subr.mxu0 0.0
    %255 = vmatpush2.msra.mxu0 0.0
    %256 = vmatprep.subr.mxu0 0.0
    %257 = vmatpush2.msra.mxu0 0.0
    %258 = vmatprep.subr.mxu0 0.0
    %259 = vmatpush2.msra.mxu0 0.0
    %260 = vmatprep.subr.mxu0 0.0
    %261 = vmatpush2.msra.mxu0 0.0
    %262 = vmatprep.mubr.f32.mxu0 0.0
    %263 = vmatmul.mubr.f32.gmra.mxu0 %v193
    %v264 = vpop.f32.mrf.mxu0
    %v265 = vadd.f32 0.0, %v264
    %v266 = vpop.f32.mrf.mxu0
    %267 = vdwg.mxu0
    %v268 = vmax.f32 %v265, 0.0
    %vm269 = vcmask 89088
    %270 = vst.msk [vmem:[#allocation2] sm:$0xff] %vm269, %v268
    // Predicated region
    $region22: #{modulated_matrix_forward.1} parent=1 // pred_check
      _
    $region23: #{modulated_matrix_forward.1} parent=1 // pred_check_branch
      %272 = sbr.rel (0) target = $region25
    $region24: #{modulated_matrix_forward.1} parent=1 // pred_region
      %s274 = ssub.s32 128, 32
      %275 = vsyncadd [#allocation3], %s274
      %s276 = sshll.u32 [#allocation2], 4
      %s277 = int_to_ptr.vmem [resolvable:$true] %s276
      %282 = dma.vmem_to_hbm [thread:$0]  %s277, 32, %s5, [#allocation3], 32, 32, 2
    $region25: #{modulated_matrix_forward.1} parent=1 // pred_fallthru
      _
    // Predicated region
    $region26: #{modulated_matrix_forward.1} parent=1 // pred_check
      _
    $region27: #{modulated_matrix_forward.1} parent=1 // pred_check_branch
      %284 = sbr.rel (0) target = $region29
    $region28: #{modulated_matrix_forward.1} parent=1 // pred_region
      %285 = dma.done [#allocation3], 128
    $region29: #{modulated_matrix_forward.1} parent=1 // pred_fallthru
      _
    %286 = vsyncpa [#allocation3], 1

</llo_original>
